<compile_context>
chip_gen: v7x
topology: tpu7x:2x2x1
jax: 0.10.0
libtpu: 0.0.40
codegen_flags: <defaults>
</compile_context>

<pallas_src>
import functools

import jax
import jax.numpy as jnp
from jax import lax
from jax.experimental import pallas as pl
from jax.experimental.pallas import tpu as pltpu

NUM_DICE_CLASSES = 9  # the PyTorch forward hard-codes `for c in range(9)`


def _dice_partial_kernel(x_ref, t_ref, out_ref, inter_acc, psum_acc, tsum_acc, *,
                         hw, tile, n_inner, needs_mask, approx_reciprocal):
    # x_ref/t_ref: (C, TILE) blocks; out_ref: (C, 128) lane-dense per-(chunk, batch) slab.
    o = pl.program_id(0)      # outer spatial chunk  ("parallel")
    s = pl.program_id(2)      # inner spatial step   ("arbitrary" reduction axis)

    @pl.when(s == 0)
    def _init():
        inter_acc[...] = jnp.zeros_like(inter_acc)
        psum_acc[...] = jnp.zeros_like(psum_acc)
        tsum_acc[...] = jnp.zeros_like(tsum_acc)

    # Cast right after load; keep all math in f32.
    x = x_ref[...].astype(jnp.float32)          # (C, TILE) logits
    t = t_ref[...].astype(jnp.float32)          # (C, TILE) target

    # Softmax2d == softmax over the channel axis (axis 0 in this layout).
    m = jnp.max(x, axis=0, keepdims=True)       # (1, TILE)
    e = jnp.exp(x - m)                          # (C, TILE)
    denom = jnp.sum(e, axis=0, keepdims=True)   # (1, TILE)
    if approx_reciprocal:
        inv = pl.reciprocal(denom, approx=True)  # EUP slot, ~free next to the exp
    else:
        inv = 1.0 / denom
    p = e * inv                                 # (C, TILE)

    if needs_mask:
        # The last spatial block may run past HW; zero the padded lanes of BOTH
        # p and t so they contribute nothing to sum(p), sum(t) or sum(p*t).
        col0 = (o * n_inner + s) * tile
        lane = lax.broadcasted_iota(jnp.int32, (1, tile), 1)
        valid = (col0 + lane) < hw              # (1, TILE), broadcasts over C
        p = jnp.where(valid, p, 0.0)
        t = jnp.where(valid, t, 0.0)

    # Per-block in-register reductions into tiny (C, 1) accumulators: no per-vreg
    # VMEM read-modify-write, so the vector-store slot never binds.
    inter_acc[...] += jnp.sum(p * t, axis=1, keepdims=True)
    psum_acc[...] += jnp.sum(p, axis=1, keepdims=True)
    tsum_acc[...] += jnp.sum(t, axis=1, keepdims=True)

    @pl.when(s == pl.num_programs(2) - 1)
    def _finalize():
        # Pack the three (C, 1) sums into one lane-dense (C, 128) slab:
        # lane 0 = sum(p*t), lane 1 = sum(p), lane 2 = sum(t), remaining lanes zero.
        c = out_ref.shape[0]
        lane = lax.broadcasted_iota(jnp.int32, (c, 128), 1)
        out = jnp.where(lane == 0, inter_acc[...], 0.0)
        out = jnp.where(lane == 1, psum_acc[...], out)
        out = jnp.where(lane == 2, tsum_acc[...], out)
        out_ref[...] = out


def _round_up(x, m):
    return (x + m - 1) // m * m


def _plan_spatial(hw, spatial_tile):
    """Fixed TILE (multiple of 128) + (n_outer, n_inner) covering ceil(hw/TILE) blocks."""
    tile = min(_round_up(max(spatial_tile, 128), 128), _round_up(hw, 128))
    n_total = -(-hw // tile)
    needs_mask = (n_total * tile != hw)
    # Split spatial blocks into an outer "parallel" chunk axis (keeps both v7x
    # TensorCores busy when N is small) and an inner reduction axis.
    n_outer = 2 if (n_total >= 2 and n_total % 2 == 0) else 1
    n_inner = n_total // n_outer
    return tile, n_outer, n_inner, needs_mask


def dice_loss(output, target, class_weights=None, *,
              smooth=1.0, spatial_tile=32768, approx_reciprocal=True):
    """output: (N, C, H, W) logits (any float dtype); target: (N, C, H, W); C >= 9."""
    N, C, H, W = output.shape
    assert target.shape == output.shape
    assert C >= NUM_DICE_CLASSES
    HW = H * W

    # Free reshapes (contiguous dims) -- no transpose, no extra HBM pass.
    x = output.reshape(N, C, HW)   # native dtype; cast to f32 happens in-kernel
    t = target.reshape(N, C, HW)

    tile, n_outer, n_inner, needs_mask = _plan_spatial(HW, spatial_tile)

    kernel = functools.partial(
        _dice_partial_kernel,
        hw=HW, tile=tile, n_inner=n_inner, needs_mask=needs_mask,
        approx_reciprocal=approx_reciprocal)

    # VMEM budget: double-buffered inputs dominate; accumulators/outputs are ~KiB.
    # Set the scoped limit explicitly (v5e defaults to 16 MiB) but cap at v7x's
    # 64 MiB physical VMEM.
    c_pad = _round_up(C, 8)
    in_block_bytes = c_pad * tile * (x.dtype.itemsize + t.dtype.itemsize)
    vmem_limit = int(min(max(32 << 20, 2 * in_block_bytes + (8 << 20)), 64 << 20))

    partials = pl.pallas_call(
        kernel,
        grid=(n_outer, N, n_inner),
        in_specs=[
            pl.BlockSpec((None, C, tile), lambda o, n, s: (n, 0, o * n_inner + s)),
            pl.BlockSpec((None, C, tile), lambda o, n, s: (n, 0, o * n_inner + s)),
        ],
        out_specs=pl.BlockSpec((None, None, C, 128), lambda o, n, s: (o, n, 0, 0)),
        out_shape=jax.ShapeDtypeStruct((n_outer, N, C, 128), jnp.float32),
        scratch_shapes=[
            pltpu.VMEM((C, 1), jnp.float32),   # running sum(p * t) per class
            pltpu.VMEM((C, 1), jnp.float32),   # running sum(p)     per class
            pltpu.VMEM((C, 1), jnp.float32),   # running sum(t)     per class
        ],
        compiler_params=pltpu.CompilerParams(
            dimension_semantics=("parallel", "parallel", "arbitrary"),
            vmem_limit_bytes=vmem_limit),
    )(x, t)

    # Tiny dice combine in plain JAX (n_outer * N * C * 128 floats).
    sums = jnp.sum(partials, axis=(0, 1))      # (C, 128)
    inter, psum, tsum = sums[:, 0], sums[:, 1], sums[:, 2]

    per_class = 1.0 - (2.0 * inter + smooth) / (psum + tsum + smooth)
    per_class = per_class[:NUM_DICE_CLASSES]
    if class_weights is not None:
        per_class = per_class * jnp.asarray(class_weights, jnp.float32)
    return jnp.sum(per_class) / N


def _dice_loss_ref(output, target, class_weights=None, smooth=1.0):
    """Plain-JAX reference mirroring the PyTorch forward."""
    N = output.shape[0]
    p = jax.nn.softmax(output.astype(jnp.float32), axis=1)
    t = target.astype(jnp.float32)
    loss = 0.0
    for c in range(NUM_DICE_CLASSES):
        iflat = p[:, c].reshape(-1)
        tflat = t[:, c].reshape(-1)
        inter = jnp.sum(iflat * tflat)
        term = 1.0 - (2.0 * inter + smooth) / (jnp.sum(iflat) + jnp.sum(tflat) + smooth)
        if class_weights is not None:
            term = class_weights[c] * term
        loss = loss + term
    return loss / N


if __name__ == "__main__":
    key = jax.random.PRNGKey(0)
    k1, k2, k3, k4, k5 = jax.random.split(key, 5)

    # --- Case 1: small, evenly tiled (N=2, C=9, 32x32) ------------------------
    N, C, H, W = 2, 9, 32, 32
    logits = jax.random.normal(k1, (N, C, H, W), jnp.float32)
    cls = jax.random.randint(k2, (N, H, W), 0, C)
    # one-hot target kept in bf16: DMA'd narrow, cast to f32 inside the kernel
    target = jax.nn.one_hot(cls, C, dtype=jnp.bfloat16).transpose(0, 3, 1, 2)
    weights = jax.random.uniform(k3, (NUM_DICE_CLASSES,), jnp.float32, 0.5, 1.5)

    ref = _dice_loss_ref(logits, target)
    ref_w = _dice_loss_ref(logits, target, class_weights=weights)

    # Exact-reciprocal path: tight-tolerance check of the kernel math.
    exact = jax.block_until_ready(dice_loss(logits, target, approx_reciprocal=False))
    exact_w = jax.block_until_ready(
        dice_loss(logits, target, class_weights=weights, approx_reciprocal=False))
    assert jnp.allclose(exact, ref, rtol=1e-5, atol=1e-5), (exact, ref)
    assert jnp.allclose(exact_w, ref_w, rtol=1e-5, atol=1e-5), (exact_w, ref_w)

    # Default fast path: EUP approximate reciprocal perturbs p by ~2^-12 relative;
    # end-to-end loss agrees to well under 5e-3.
    fast = jax.block_until_ready(dice_loss(logits, target))
    assert jnp.allclose(fast, ref, rtol=5e-3, atol=5e-3), (fast, ref)

    # --- Case 2: ragged spatial size (HW=500) exercising the masked tail, a
    #             multi-step reduction axis, the outer "parallel" spatial-chunk
    #             axis, and bf16 logits ---------------------------------------
    N2, C2, H2, W2 = 2, 9, 20, 25          # HW=500 -> tile=128, 4 blocks (2 outer x 2 inner)
    logits2 = jax.random.normal(k4, (N2, C2, H2, W2), jnp.bfloat16)
    cls2 = jax.random.randint(k5, (N2, H2, W2), 0, C2)
    target2 = jax.nn.one_hot(cls2, C2, dtype=jnp.bfloat16).transpose(0, 3, 1, 2)

    ref2 = _dice_loss_ref(logits2, target2, class_weights=weights)
    exact2 = jax.block_until_ready(
        dice_loss(logits2, target2, class_weights=weights,
                  spatial_tile=128, approx_reciprocal=False))
    assert jnp.allclose(exact2, ref2, rtol=1e-4, atol=1e-4), (exact2, ref2)

    print("KERNEL_OK")
</pallas_src>

<mosaic_0001>
module attributes {stable_mosaic.version = 11 : i64} {
  func.func @_dice_partial_kernel(%arg0: i32, %arg1: i32, %arg2: i32, %arg3: memref<1x9x1024xf32, #tpu.memory_space<vmem>>, %arg4: memref<1x9x1024xbf16, #tpu.memory_space<vmem>>, %arg5: memref<1x1x9x128xf32, #tpu.memory_space<vmem>>, %arg6: memref<9x1xf32, #tpu.memory_space<vmem>>, %arg7: memref<9x1xf32, #tpu.memory_space<vmem>>, %arg8: memref<9x1xf32, #tpu.memory_space<vmem>>) attributes {dimension_semantics = [#tpu.dimension_semantics<parallel>, #tpu.dimension_semantics<parallel>, #tpu.dimension_semantics<arbitrary>], iteration_bounds = array<i64: 1, 2, 1>, scalar_prefetch = 0 : i64, scratch_operands = 3 : i64, tpu.core_type = #tpu.core_type<tc>, window_params = [{transform_indices = @transform_0, window_bounds = array<i64: 1, 9, 1024>}, {transform_indices = @transform_1, window_bounds = array<i64: 1, 9, 1024>}, {transform_indices = @transform_2, window_bounds = array<i64: 1, 1, 9, 128>}]} {
    %c0_i32 = arith.constant 0 : i32
    %0 = arith.cmpi eq, %arg2, %c0_i32 : i32
    %1 = arith.extui %0 : i1 to i32
    %c0_i32_0 = arith.constant 0 : i32
    %2 = arith.cmpi ne, %1, %c0_i32_0 : i32
    scf.if %2 {
      %cst_25 = arith.constant 0.000000e+00 : f32
      %38 = vector.broadcast %cst_25 : f32 to vector<9x1xf32>
      %c0_26 = arith.constant 0 : index
      %c0_27 = arith.constant 0 : index
      %39 = vector.load %arg6[%c0_26, %c0_27] : memref<9x1xf32, #tpu.memory_space<vmem>>, vector<9x1xf32>
      tpu.vector_store %arg6[%c0_26, %c0_27], %38 {strides = array<i32>} : memref<9x1xf32, #tpu.memory_space<vmem>>, vector<9x1xf32>,
      %cst_28 = arith.constant 0.000000e+00 : f32
      %40 = vector.broadcast %cst_28 : f32 to vector<9x1xf32>
      %c0_29 = arith.constant 0 : index
      %c0_30 = arith.constant 0 : index
      %41 = vector.load %arg7[%c0_29, %c0_30] : memref<9x1xf32, #tpu.memory_space<vmem>>, vector<9x1xf32>
      tpu.vector_store %arg7[%c0_29, %c0_30], %40 {strides = array<i32>} : memref<9x1xf32, #tpu.memory_space<vmem>>, vector<9x1xf32>,
      %cst_31 = arith.constant 0.000000e+00 : f32
      %42 = vector.broadcast %cst_31 : f32 to vector<9x1xf32>
      %c0_32 = arith.constant 0 : index
      %c0_33 = arith.constant 0 : index
      %43 = vector.load %arg8[%c0_32, %c0_33] : memref<9x1xf32, #tpu.memory_space<vmem>>, vector<9x1xf32>
      tpu.vector_store %arg8[%c0_32, %c0_33], %42 {strides = array<i32>} : memref<9x1xf32, #tpu.memory_space<vmem>>, vector<9x1xf32>,
    } else {
    }
    %c0 = arith.constant 0 : index
    %c0_1 = arith.constant 0 : index
    %c0_2 = arith.constant 0 : index
    %3 = vector.load %arg3[%c0, %c0_1, %c0_2] : memref<1x9x1024xf32, #tpu.memory_space<vmem>>, vector<1x9x1024xf32>
    %4 = vector.shape_cast %3 : vector<1x9x1024xf32> to vector<9x1024xf32>
    %c0_3 = arith.constant 0 : index
    %c0_4 = arith.constant 0 : index
    %c0_5 = arith.constant 0 : index
    %5 = vector.load %arg4[%c0_3, %c0_4, %c0_5] : memref<1x9x1024xbf16, #tpu.memory_space<vmem>>, vector<1x9x1024xbf16>
    %6 = vector.shape_cast %5 : vector<1x9x1024xbf16> to vector<9x1024xbf16>
    %7 = arith.extf %6 : vector<9x1024xbf16> to vector<9x1024xf32>
    %cst = arith.constant dense<0xFF800000> : vector<1024xf32>
    %8 = vector.multi_reduction <maximumf>, %4, %cst [0] : vector<9x1024xf32> to vector<1024xf32>
    %9 = vector.shape_cast %8 : vector<1024xf32> to vector<1x1024xf32>
    %10 = vector.broadcast %9 : vector<1x1024xf32> to vector<9x1024xf32>
    %11 = arith.subf %4, %10 : vector<9x1024xf32>
    %12 = math.exp %11 : vector<9x1024xf32>
    %cst_6 = arith.constant dense<0.000000e+00> : vector<1024xf32>
    %13 = vector.multi_reduction <add>, %12, %cst_6 [0] : vector<9x1024xf32> to vector<1024xf32>
    %14 = vector.shape_cast %13 : vector<1024xf32> to vector<1x1024xf32>
    %cst_7 = arith.constant 1.000000e+00 : f32
    %15 = vector.broadcast %cst_7 : f32 to vector<1x1024xf32>
    %16 = arith.divf %15, %14 : vector<1x1024xf32>
    %17 = vector.broadcast %16 : vector<1x1024xf32> to vector<9x1024xf32>
    %18 = arith.mulf %12, %17 : vector<9x1024xf32>
    %c0_8 = arith.constant 0 : index
    %c0_9 = arith.constant 0 : index
    %19 = vector.load %arg6[%c0_8, %c0_9] : memref<9x1xf32, #tpu.memory_space<vmem>>, vector<9x1xf32>
    %20 = arith.mulf %18, %7 : vector<9x1024xf32>
    %cst_10 = arith.constant dense<0.000000e+00> : vector<9xf32>
    %21 = vector.multi_reduction <add>, %20, %cst_10 [1] : vector<9x1024xf32> to vector<9xf32>
    %22 = vector.shape_cast %21 : vector<9xf32> to vector<9x1xf32>
    %23 = arith.addf %19, %22 : vector<9x1xf32>
    %c0_11 = arith.constant 0 : index
    %c0_12 = arith.constant 0 : index
    %24 = vector.load %arg6[%c0_11, %c0_12] : memref<9x1xf32, #tpu.memory_space<vmem>>, vector<9x1xf32>
    tpu.vector_store %arg6[%c0_11, %c0_12], %23 {strides = array<i32>} : memref<9x1xf32, #tpu.memory_space<vmem>>, vector<9x1xf32>,
    %c0_13 = arith.constant 0 : index
    %c0_14 = arith.constant 0 : index
    %25 = vector.load %arg7[%c0_13, %c0_14] : memref<9x1xf32, #tpu.memory_space<vmem>>, vector<9x1xf32>
    %cst_15 = arith.constant dense<0.000000e+00> : vector<9xf32>
    %26 = vector.multi_reduction <add>, %18, %cst_15 [1] : vector<9x1024xf32> to vector<9xf32>
    %27 = vector.shape_cast %26 : vector<9xf32> to vector<9x1xf32>
    %28 = arith.addf %25, %27 : vector<9x1xf32>
    %c0_16 = arith.constant 0 : index
    %c0_17 = arith.constant 0 : index
    %29 = vector.load %arg7[%c0_16, %c0_17] : memref<9x1xf32, #tpu.memory_space<vmem>>, vector<9x1xf32>
    tpu.vector_store %arg7[%c0_16, %c0_17], %28 {strides = array<i32>} : memref<9x1xf32, #tpu.memory_space<vmem>>, vector<9x1xf32>,
    %c0_18 = arith.constant 0 : index
    %c0_19 = arith.constant 0 : index
    %30 = vector.load %arg8[%c0_18, %c0_19] : memref<9x1xf32, #tpu.memory_space<vmem>>, vector<9x1xf32>
    %cst_20 = arith.constant dense<0.000000e+00> : vector<9xf32>
    %31 = vector.multi_reduction <add>, %7, %cst_20 [1] : vector<9x1024xf32> to vector<9xf32>
    %32 = vector.shape_cast %31 : vector<9xf32> to vector<9x1xf32>
    %33 = arith.addf %30, %32 : vector<9x1xf32>
    %c0_21 = arith.constant 0 : index
    %c0_22 = arith.constant 0 : index
    %34 = vector.load %arg8[%c0_21, %c0_22] : memref<9x1xf32, #tpu.memory_space<vmem>>, vector<9x1xf32>
    tpu.vector_store %arg8[%c0_21, %c0_22], %33 {strides = array<i32>} : memref<9x1xf32, #tpu.memory_space<vmem>>, vector<9x1xf32>,
    %c0_i32_23 = arith.constant 0 : i32
    %35 = arith.cmpi eq, %arg2, %c0_i32_23 : i32
    %36 = arith.extui %35 : i1 to i32
    %c0_i32_24 = arith.constant 0 : i32
    %37 = arith.cmpi ne, %36, %c0_i32_24 : i32
    scf.if %37 {
      %38 = tpu.iota {dimensions = array<i32: 1>} : vector<9x128xi32>
      %c0_i32_25 = arith.constant 0 : i32
      %39 = vector.broadcast %c0_i32_25 : i32 to vector<9x128xi32>
      %40 = arith.cmpi eq, %38, %39 : vector<9x128xi32>
      %c0_26 = arith.constant 0 : index
      %c0_27 = arith.constant 0 : index
      %41 = vector.load %arg6[%c0_26, %c0_27] : memref<9x1xf32, #tpu.memory_space<vmem>>, vector<9x1xf32>
      %cst_28 = arith.constant 0.000000e+00 : f32
      %42 = vector.shape_cast %41 : vector<9x1xf32> to vector<9x1xf32>
      %43 = vector.broadcast %42 : vector<9x1xf32> to vector<9x128xf32>
      %44 = vector.broadcast %cst_28 : f32 to vector<9x128xf32>
      %45 = arith.select %40, %43, %44 : vector<9x128xi1>, vector<9x128xf32>
      %c1_i32 = arith.constant 1 : i32
      %46 = vector.broadcast %c1_i32 : i32 to vector<9x128xi32>
      %47 = arith.cmpi eq, %38, %46 : vector<9x128xi32>
      %c0_29 = arith.constant 0 : index
      %c0_30 = arith.constant 0 : index
      %48 = vector.load %arg7[%c0_29, %c0_30] : memref<9x1xf32, #tpu.memory_space<vmem>>, vector<9x1xf32>
      %49 = vector.shape_cast %48 : vector<9x1xf32> to vector<9x1xf32>
      %50 = vector.broadcast %49 : vector<9x1xf32> to vector<9x128xf32>
      %51 = arith.select %47, %50, %45 : vector<9x128xi1>, vector<9x128xf32>
      %c2_i32 = arith.constant 2 : i32
      %52 = vector.broadcast %c2_i32 : i32 to vector<9x128xi32>
      %53 = arith.cmpi eq, %38, %52 : vector<9x128xi32>
      %c0_31 = arith.constant 0 : index
      %c0_32 = arith.constant 0 : index
      %54 = vector.load %arg8[%c0_31, %c0_32] : memref<9x1xf32, #tpu.memory_space<vmem>>, vector<9x1xf32>
      %55 = vector.shape_cast %54 : vector<9x1xf32> to vector<9x1xf32>
      %56 = vector.broadcast %55 : vector<9x1xf32> to vector<9x128xf32>
      %57 = arith.select %53, %56, %51 : vector<9x128xi1>, vector<9x128xf32>
      %c0_33 = arith.constant 0 : index
      %c0_34 = arith.constant 0 : index
      %c0_35 = arith.constant 0 : index
      %c0_36 = arith.constant 0 : index
      %58 = vector.load %arg5[%c0_33, %c0_34, %c0_35, %c0_36] : memref<1x1x9x128xf32, #tpu.memory_space<vmem>>, vector<1x1x9x128xf32>
      %59 = vector.shape_cast %58 : vector<1x1x9x128xf32> to vector<9x128xf32>
      %60 = vector.shape_cast %57 : vector<9x128xf32> to vector<1x1x9x128xf32>
      tpu.vector_store %arg5[%c0_33, %c0_34, %c0_35, %c0_36], %60 {strides = array<i32>} : memref<1x1x9x128xf32, #tpu.memory_space<vmem>>, vector<1x1x9x128xf32>,
    } else {
    }
    return
  }
  func.func @transform_0(%arg0: i32, %arg1: i32, %arg2: i32) -> (i32, i32, i32) {
    %c1_i32 = arith.constant 1 : i32
    %0 = arith.muli %arg0, %c1_i32 : i32
    %1 = arith.addi %0, %arg2 : i32
    %c0_i32 = arith.constant 0 : i32
    %c0_i32_0 = arith.constant 0 : i32
    return %arg1, %c0_i32, %1 : i32, i32, i32
  }
  func.func @transform_1(%arg0: i32, %arg1: i32, %arg2: i32) -> (i32, i32, i32) {
    %c1_i32 = arith.constant 1 : i32
    %0 = arith.muli %arg0, %c1_i32 : i32
    %1 = arith.addi %0, %arg2 : i32
    %c0_i32 = arith.constant 0 : i32
    %c0_i32_0 = arith.constant 0 : i32
    return %arg1, %c0_i32, %1 : i32, i32, i32
  }
  func.func @transform_2(%arg0: i32, %arg1: i32, %arg2: i32) -> (i32, i32, i32, i32) {
    %c0_i32 = arith.constant 0 : i32
    %c0_i32_0 = arith.constant 0 : i32
    %c0_i32_1 = arith.constant 0 : i32
    return %arg0, %arg1, %c0_i32, %c0_i32_0 : i32, i32, i32, i32
  }
}

</mosaic_0001>

<llo_original>
// kernel: tpu_custom_call.1
$region0: #{tpu_custom_call.1}
  #allocation0 [shape = 'u32[]', space=smem, size = 0x4, offset = 0x4, fixed_abs, tag = 'smem constant byte address 0x4 - core index']
  #allocation1 [shape = 'u32[144,128]{1,0:T(1,128)}', space=vmem, size = 0x12000, scoped, tag = 'internal scratch']
  #allocation2 [shape = 'f32[9,1]{1,0:T(8,128)}', space=vmem, size = 0x2000, scoped, tag = 'scratch operand']
  #allocation3 [shape = 'f32[9,1]{1,0:T(8,128)}', space=vmem, size = 0x2000, scoped, tag = 'scratch operand']
  #allocation4 [shape = 'f32[9,1]{1,0:T(8,128)}', space=vmem, size = 0x2000, scoped, tag = 'scratch operand']
  %s0 = inlined_call_operand.vmem [shape: f32[2,9,1024], index: 0, kind: input, shape index: {}]
  %s1 = inlined_call_operand.vmem [shape: bf16[2,9,1024], index: 1, kind: input, shape index: {}]
  %s2 = inlined_call_operand.vmem [shape: f32[1,2,9,128], index: 2, kind: output, shape index: {}]
  %s3 = sld [smem:[#allocation0]]
  $region49: #{tpu_custom_call.1} parent=0
    _
  %s5 = ssub.s32 1, %s3
  %s6 = scalar_select 0, %s5, %s3
  loop: start=0, step=1, limit=4
  $region2: #{tpu_custom_call.1} parent=0 // loop_pre_header
    _
  $region3: #{tpu_custom_call.1} parent=0 // loop_header
    %s8 = sphi 0, %s12
    %p9 = scmp.ge.s32.totalorder %s8, 4
    %s15 = sphi 0, %s34
    %s16 = sphi 0, %s30
    %s17 = sphi 0, %s26
    %s18 = sphi 0, %s15
    %s19 = sphi 0, %s16
    %s20 = sphi 0, %s17
    %s21 = sphi 0, %s18
    %s22 = sphi 0, %s19
    %s23 = sphi 0, %s20
    %s41 = sphi 0, %s43
    %s44 = sphi 0, %s41
    %s45 = sphi 0, %s44
    %s61 = sphi 0, %s45
    %s71 = sphi 0, %s73
    %s74 = sphi 0, %s71
    %s75 = sphi 0, %s74
    %s91 = sphi 0, %s75
    %s99 = sphi 0, %s101
    %s102 = sphi 0, %s99
    %s103 = sphi 0, %s102
    %s119 = sphi 0, %s103
  $region4: #{tpu_custom_call.1} parent=0 // loop_header_branch
    %11 = sbr.rel (%p9) target = $region8
  $region5: #{tpu_custom_call.1} parent=0 // loop_body
    %s13 = ssub.s32 %s8, 1
    %s14 = ssub.s32 %s8, 2
    %s24 = sadd.s32 1, %s17
    %p25 = scmp.ge.s32.totalorder %s24, 1
    %s26 = scalar_select %p25, 0, %s24
    %s27 = sadd.s32 1, %s16
    %s28 = scalar_select %p25, %s27, %s16
    %p29 = scmp.ge.s32.totalorder %s28, 2
    %s30 = scalar_select %p29, 0, %s28
    %s31 = sadd.s32 1, %s15
    %s32 = scalar_select %p29, %s31, %s15
    %p33 = scmp.ge.s32.totalorder %s32, 1
    %s34 = scalar_select %p33, 0, %s32
    %s35 = sadd.s32 %s15, %s17
    %s36 = sadd.s32 %s34, %s26
    %s37 = ssub.s32 %s16, %s30
    %s38 = ssub.s32 %s35, %s36
    %s39 = sor.u32 %s37, %s38
    %p40 = scmp.eq.s32.totalorder %s39, 0
    %s42 = sadd.s32 %s41, 1
    %s43 = scalar_select %p40, %s41, %s42
    %p46 = pneg %p40
    %p47 = scmp.eq.s32.totalorder %s8, 1
    %p48 = por %p46, %p47
    %p49 = scmp.ne.s32.totalorder %s41, %s44
    %p50 = scmp.eq.s32.totalorder %s8, 0
    %p51 = por %p49, %p50
    %p52 = scmp.ne.s32.totalorder %s41, %s44
    %p53 = scmp.eq.s32.totalorder %s13, 1
    %p54 = por %p52, %p53
    %p55 = scmp.ne.s32.totalorder %s44, %s45
    %p56 = scmp.eq.s32.totalorder %s13, 0
    %p57 = por %p55, %p56
    %p58 = scmp.ne.s32.totalorder %s44, %s45
    %p59 = scmp.eq.s32.totalorder %s14, 1
    %p60 = por %p58, %p59
    %p62 = scmp.ne.s32.totalorder %s45, %s61
    %p63 = scmp.eq.s32.totalorder %s14, 0
    %p64 = por %p62, %p63
    %s65 = sadd.s32 %s15, %s17
    %s66 = sadd.s32 %s34, %s26
    %s67 = ssub.s32 %s16, %s30
    %s68 = ssub.s32 %s65, %s66
    %s69 = sor.u32 %s67, %s68
    %p70 = scmp.eq.s32.totalorder %s69, 0
    %s72 = sadd.s32 %s71, 1
    %s73 = scalar_select %p70, %s71, %s72
    %p76 = pneg %p70
    %p77 = scmp.eq.s32.totalorder %s8, 1
    %p78 = por %p76, %p77
    %p79 = scmp.ne.s32.totalorder %s71, %s74
    %p80 = scmp.eq.s32.totalorder %s8, 0
    %p81 = por %p79, %p80
    %p82 = scmp.ne.s32.totalorder %s71, %s74
    %p83 = scmp.eq.s32.totalorder %s13, 1
    %p84 = por %p82, %p83
    %p85 = scmp.ne.s32.totalorder %s74, %s75
    %p86 = scmp.eq.s32.totalorder %s13, 0
    %p87 = por %p85, %p86
    %p88 = scmp.ne.s32.totalorder %s74, %s75
    %p89 = scmp.eq.s32.totalorder %s14, 1
    %p90 = por %p88, %p89
    %p92 = scmp.ne.s32.totalorder %s75, %s91
    %p93 = scmp.eq.s32.totalorder %s14, 0
    %p94 = por %p92, %p93
    %s95 = ssub.s32 %s15, %s34
    %s96 = ssub.s32 %s16, %s30
    %s97 = sor.u32 %s95, %s96
    %p98 = scmp.eq.s32.totalorder %s97, 0
    %s100 = sadd.s32 %s99, 1
    %s101 = scalar_select %p98, %s99, %s100
    %p104 = pneg %p98
    %p105 = scmp.eq.s32.totalorder %s8, 1
    %p106 = por %p104, %p105
    %p107 = scmp.ne.s32.totalorder %s99, %s102
    %p108 = scmp.eq.s32.totalorder %s8, 0
    %p109 = por %p107, %p108
    %p110 = scmp.ne.s32.totalorder %s99, %s102
    %p111 = scmp.eq.s32.totalorder %s13, 1
    %p112 = por %p110, %p111
    %p113 = scmp.ne.s32.totalorder %s102, %s103
    %p114 = scmp.eq.s32.totalorder %s13, 0
    %p115 = por %p113, %p114
    %p116 = scmp.ne.s32.totalorder %s102, %s103
    %p117 = scmp.eq.s32.totalorder %s14, 1
    %p118 = por %p116, %p117
    %p120 = scmp.ne.s32.totalorder %s103, %s119
    %p121 = scmp.eq.s32.totalorder %s14, 0
    %p122 = por %p120, %p121
    %p123 = scmp.le.s32.totalorder 1, %s8
    %p124 = scmp.lt.s32.totalorder %s8, 3
    %p125 = pnand %p123, %p124
    %p126 = pneg %p125
    // Predicated region
    $region9: #{tpu_custom_call.1} parent=5 // pred_check
      _
    $region10: #{tpu_custom_call.1} parent=5 // pred_check_branch
      %128 = sbr.rel (%p125) target = $region12
    $region11: #{tpu_custom_call.1} parent=5 // pred_region
      %s129 = ssub.s32 %s8, 1
    $region12: #{tpu_custom_call.1} parent=5 // pred_fallthru
      _
    %p130 = scmp.lt.s32.totalorder %s8, 2
    // Predicated region
    $region13: #{tpu_custom_call.1} parent=5 // pred_check
      %p131 = pneg %p130
    $region14: #{tpu_custom_call.1} parent=5 // pred_check_branch
      %133 = sbr.rel (%p131) target = $region16
    $region15: #{tpu_custom_call.1} parent=5 // pred_region
      // Predicated region
      $region17: #{tpu_custom_call.1} parent=15 // pred_check
        %p134 = pneg %p51
      $region18: #{tpu_custom_call.1} parent=15 // pred_check_branch
        %136 = sbr.rel (%p134) target = $region20
      $region19: #{tpu_custom_call.1} parent=15 // pred_region
        %s137 = sadd.s32 %s15, %s17
        %s138 = smul.u32 8, %s137
        %p139 = scmp.lt.s32.totalorder %s16, 1
        %s140 = scalar_select %p139, %s16, 1
        %p141 = scmp.lt.s32.totalorder %s138, 7
        %s142 = scalar_select %p141, %s138, 7
        %s143 = smul.addr %s140, 16
        %s144 = sadd.s32 %s142, %s143
        %s145 = smul.addr %s144, 8
        %s146 = scalar_lea.vmem %s0, %s145
        %s147 = sadd.s32 %s15, %s17
        %s148 = smul.u32 8, %s147
      $region20: #{tpu_custom_call.1} parent=15 // pred_fallthru
        _
      // Predicated region
      $region21: #{tpu_custom_call.1} parent=15 // pred_check
        %p149 = pneg %p81
      $region22: #{tpu_custom_call.1} parent=15 // pred_check_branch
        %151 = sbr.rel (%p149) target = $region24
      $region23: #{tpu_custom_call.1} parent=15 // pred_region
        %s152 = sadd.s32 %s15, %s17
        %s153 = smul.u32 8, %s152
        %p154 = scmp.lt.s32.totalorder %s16, 1
        %s155 = scalar_select %p154, %s16, 1
        %p156 = scmp.lt.s32.totalorder %s153, 7
        %s157 = scalar_select %p156, %s153, 7
        %s158 = smul.addr %s155, 16
        %s159 = sadd.s32 %s157, %s158
        %s160 = smul.addr %s159, 4
        %s161 = scalar_lea.vmem %s1, %s160
        %s162 = sadd.s32 %s15, %s17
        %s163 = smul.u32 8, %s162
      $region24: #{tpu_custom_call.1} parent=15 // pred_fallthru
        _
    $region16: #{tpu_custom_call.1} parent=5 // pred_fallthru
      _
    %p164 = scmp.le.s32.totalorder 1, %s8
    %p165 = scmp.lt.s32.totalorder %s8, 3
    %p166 = pnand %p164, %p165
    %p167 = pneg %p166
    // Predicated region
    $region25: #{tpu_custom_call.1} parent=5 // pred_check
      _
    $region26: #{tpu_custom_call.1} parent=5 // pred_check_branch
      %169 = sbr.rel (%p166) target = $region28
    $region27: #{tpu_custom_call.1} parent=5 // pred_region
      %s170 = ssub.s32 %s8, 1
      %s171 = sadd.s32 %s18, %s20
      %s172 = smul.u32 8, %s171
      %p173 = scmp.lt.s32.totalorder %s19, 1
      %s174 = scalar_select %p173, %s19, 1
      %p175 = scmp.lt.s32.totalorder %s172, 7
      %s176 = scalar_select %p175, %s172, 7
      %s177 = smul.addr %s174, 16
      %s178 = sadd.s32 %s176, %s177
      %s179 = smul.addr %s178, 8
      %s180 = scalar_lea.vmem %s0, %s179
      %p181 = pneg %p57
      %p182 = pneg %p54
      %s183 = sadd.s32 %s18, %s20
      %s184 = smul.u32 8, %s183
      %p185 = scmp.lt.s32.totalorder %s19, 1
      %s186 = scalar_select %p185, %s19, 1
      %p187 = scmp.lt.s32.totalorder %s184, 7
      %s188 = scalar_select %p187, %s184, 7
      %s189 = smul.addr %s186, 16
      %s190 = sadd.s32 %s188, %s189
      %s191 = smul.addr %s190, 4
      %s192 = scalar_lea.vmem %s1, %s191
      %p193 = pneg %p87
      %p194 = pneg %p84
      %p195 = pneg %p115
      %p196 = pneg %p112
      %p197 = scmp.lt.s32.totalorder %s18, 0
      %s198 = scalar_select %p197, %s18, 0
      %p199 = scmp.lt.s32.totalorder %s19, 1
      %s200 = scalar_select %p199, %s19, 1
      %s201 = smul.addr %s200, 2
      %s202 = smul.addr %s198, 4
      %s203 = sadd.s32 %s201, %s202
      %s204 = smul.addr %s203, 8
      %s205 = scalar_lea.vmem %s2, %s204
      %s206 = sadd.s32 %s18, %s20
      %s207 = smul.u32 8, %s206
      %p208 = scmp.lt.s32.totalorder %s19, 1
      %s209 = scalar_select %p208, %s19, 1
      %p210 = scmp.lt.s32.totalorder %s207, 7
      %s211 = scalar_select %p210, %s207, 7
      %s212 = smul.addr %s209, 16
      %s213 = sadd.s32 %s211, %s212
      %s214 = smul.addr %s213, 8
      %s215 = scalar_lea.vmem %s0, %s214
      %s216 = sadd.s32 %s18, %s20
      %s217 = smul.u32 8, %s216
      %s218 = sadd.s32 %s18, %s20
      %s219 = smul.u32 8, %s218
      %p220 = scmp.lt.s32.totalorder %s19, 1
      %s221 = scalar_select %p220, %s19, 1
      %p222 = scmp.lt.s32.totalorder %s219, 7
      %s223 = scalar_select %p222, %s219, 7
      %s224 = smul.addr %s221, 16
      %s225 = sadd.s32 %s223, %s224
      %s226 = smul.addr %s225, 4
      %s227 = scalar_lea.vmem %s1, %s226
      %s228 = sadd.s32 %s18, %s20
      %s229 = smul.u32 8, %s228
      %p230 = scmp.lt.s32.totalorder %s18, 0
      %s231 = scalar_select %p230, %s18, 0
      %p232 = scmp.lt.s32.totalorder %s19, 1
      %s233 = scalar_select %p232, %s19, 1
      %s234 = smul.addr %s233, 2
      %s235 = smul.addr %s231, 4
      %s236 = sadd.s32 %s234, %s235
      %s237 = smul.addr %s236, 8
      %s238 = scalar_lea.vmem %s2, %s237
      %p239 = scmp.eq.s32.totalorder %s20, 0
      // Predicated region
      $region29: #{tpu_custom_call.1} parent=27 // pred_check
        %p240 = pneg %p239
      $region30: #{tpu_custom_call.1} parent=27 // pred_check_branch
        %242 = sbr.rel (%p240) target = $region32
      $region31: #{tpu_custom_call.1} parent=27 // pred_region
        %vm243 = vcmask 7168
        %244 = vst.msk [vmem:[#allocation2] sm:$0xff] %vm243, 0.0
        %vm245 = vcmask 0
        %246 = vst.msk [vmem:[#allocation2 + $0x8] sm:$0x1] %vm245, 0.0
        %247 = vst.msk [vmem:[#allocation3] sm:$0xff] %vm243, 0.0
        %248 = vst.msk [vmem:[#allocation3 + $0x8] sm:$0x1] %vm245, 0.0
        %249 = vst.msk [vmem:[#allocation4] sm:$0xff] %vm243, 0.0
        %250 = vst.msk [vmem:[#allocation4 + $0x8] sm:$0x1] %vm245, 0.0
      $region32: #{tpu_custom_call.1} parent=27 // pred_fallthru
        _
      %v251 = vld [vmem:[%s215] sm:$0xff]
      %v252 = vld [vmem:[%s215 + $0x8] sm:$0xff]
      %v253 = vld [vmem:[%s215 + $0x10] sm:$0xff]
      %v254 = vld [vmem:[%s215 + $0x18] sm:$0xff]
      %v255 = vld [vmem:[%s215 + $0x20] sm:$0xff]
      %v256 = vld [vmem:[%s215 + $0x28] sm:$0xff]
      %v257 = vld [vmem:[%s215 + $0x30] sm:$0xff]
      %v258 = vld [vmem:[%s215 + $0x38] sm:$0xff]
      %v259 = vld [vmem:[%s215 + $0x40] sm:$0x1]
      %v260 = vld [vmem:[%s215 + $0x48] sm:$0x1]
      %v261 = vld [vmem:[%s215 + $0x50] sm:$0x1]
      %v262 = vld [vmem:[%s215 + $0x58] sm:$0x1]
      %v263 = vld [vmem:[%s215 + $0x60] sm:$0x1]
      %v264 = vld [vmem:[%s215 + $0x68] sm:$0x1]
      %v265 = vld [vmem:[%s215 + $0x70] sm:$0x1]
      %v266 = vld [vmem:[%s215 + $0x78] sm:$0x1]
      %v267 = vld [vmem:[%s227] sm:$0xff]
      %v268 = vld [vmem:[%s227 + $0x8] sm:$0xff]
      %v269 = vld [vmem:[%s227 + $0x10] sm:$0xff]
      %v270 = vld [vmem:[%s227 + $0x18] sm:$0xff]
      %v271 = vld [vmem:[%s227 + $0x20] sm:$0x11]
      %v272 = vld [vmem:[%s227 + $0x28] sm:$0x11]
      %v273 = vld [vmem:[%s227 + $0x30] sm:$0x11]
      %v274 = vld [vmem:[%s227 + $0x38] sm:$0x11]
      %v275 = vunpack.c.l.bf16 %v267
      %v276 = vunpack.c.h.bf16 %v267
      %v277 = vunpack.c.l.bf16 %v268
      %v278 = vunpack.c.h.bf16 %v268
      %v279 = vunpack.c.l.bf16 %v269
      %v280 = vunpack.c.h.bf16 %v269
      %v281 = vunpack.c.l.bf16 %v270
      %v282 = vunpack.c.h.bf16 %v270
      %v283 = vunpack.c.l.bf16 %v271
      %v284 = vunpack.c.h.bf16 %v271
      %v285 = vunpack.c.l.bf16 %v272
      %v286 = vunpack.c.h.bf16 %v272
      %v287 = vunpack.c.l.bf16 %v273
      %v288 = vunpack.c.h.bf16 %v273
      %v289 = vunpack.c.l.bf16 %v274
      %v290 = vunpack.c.h.bf16 %v274
      %vm291 = vcmask 1040384
      %v292 = vsel %vm291, %v259, -inf
      %v293 = vmax.f32 %v251, %v292
      %v294 = vrot.slane %v293, 4
      %v295 = vmax.f32 %v293, %v294
      %v296 = vrot.slane %v295, 2
      %v297 = vmax.f32 %v295, %v296
      %v298 = vrot.slane %v297, 1
      %v299 = vmax.f32 %v297, %v298
      %v300 = vsel %vm291, %v260, -inf
      %v301 = vmax.f32 %v252, %v300
      %v302 = vrot.slane %v301, 4
      %v303 = vmax.f32 %v301, %v302
      %v304 = vrot.slane %v303, 2
      %v305 = vmax.f32 %v303, %v304
      %v306 = vrot.slane %v305, 1
      %v307 = vmax.f32 %v305, %v306
      %v308 = vsel %vm291, %v261, -inf
      %v309 = vmax.f32 %v253, %v308
      %v310 = vrot.slane %v309, 4
      %v311 = vmax.f32 %v309, %v310
      %v312 = vrot.slane %v311, 2
      %v313 = vmax.f32 %v311, %v312
      %v314 = vrot.slane %v313, 1
      %v315 = vmax.f32 %v313, %v314
      %v316 = vsel %vm291, %v262, -inf
      %v317 = vmax.f32 %v254, %v316
      %v318 = vrot.slane %v317, 4
      %v319 = vmax.f32 %v317, %v318
      %v320 = vrot.slane %v319, 2
      %v321 = vmax.f32 %v319, %v320
      %v322 = vrot.slane %v321, 1
      %v323 = vmax.f32 %v321, %v322
      %v324 = vsel %vm291, %v263, -inf
      %v325 = vmax.f32 %v255, %v324
      %v326 = vrot.slane %v325, 4
      %v327 = vmax.f32 %v325, %v326
      %v328 = vrot.slane %v327, 2
      %v329 = vmax.f32 %v327, %v328
      %v330 = vrot.slane %v329, 1
      %v331 = vmax.f32 %v329, %v330
      %v332 = vsel %vm291, %v264, -inf
      %v333 = vmax.f32 %v256, %v332
      %v334 = vrot.slane %v333, 4
      %v335 = vmax.f32 %v333, %v334
      %v336 = vrot.slane %v335, 2
      %v337 = vmax.f32 %v335, %v336
      %v338 = vrot.slane %v337, 1
      %v339 = vmax.f32 %v337, %v338
      %v340 = vsel %vm291, %v265, -inf
      %v341 = vmax.f32 %v257, %v340
      %v342 = vrot.slane %v341, 4
      %v343 = vmax.f32 %v341, %v342
      %v344 = vrot.slane %v343, 2
      %v345 = vmax.f32 %v343, %v344
      %v346 = vrot.slane %v345, 1
      %v347 = vmax.f32 %v345, %v346
      %v348 = vsel %vm291, %v266, -inf
      %v349 = vmax.f32 %v258, %v348
      %v350 = vrot.slane %v349, 4
      %v351 = vmax.f32 %v349, %v350
      %v352 = vrot.slane %v351, 2
      %v353 = vmax.f32 %v351, %v352
      %v354 = vrot.slane %v353, 1
      %v355 = vmax.f32 %v353, %v354
      %v356 = vsub.f32 %v251, %v299
      %v357 = vsub.f32 %v252, %v307
      %v358 = vsub.f32 %v253, %v315
      %v359 = vsub.f32 %v254, %v323
      %v360 = vsub.f32 %v255, %v331
      %v361 = vsub.f32 %v256, %v339
      %v362 = vsub.f32 %v257, %v347
      %v363 = vsub.f32 %v258, %v355
      %v364 = vsub.f32 %v259, %v299
      %v365 = vsub.f32 %v260, %v307
      %v366 = vsub.f32 %v261, %v315
      %v367 = vsub.f32 %v262, %v323
      %v368 = vsub.f32 %v263, %v331
      %v369 = vsub.f32 %v264, %v339
      %v370 = vsub.f32 %v265, %v347
      %v371 = vsub.f32 %v266, %v355
      %v372 = vmul.f32 %v356, 1.442695
      %v373 = vpow.pop %v372
      %v374 = vmul.f32 %v357, 1.442695
      %v375 = vpow.pop %v374
      %v376 = vmul.f32 %v358, 1.442695
      %v377 = vpow.pop %v376
      %v378 = vmul.f32 %v359, 1.442695
      %v379 = vpow.pop %v378
      %v380 = vmul.f32 %v360, 1.442695
      %v381 = vpow.pop %v380
      %v382 = vmul.f32 %v361, 1.442695
      %v383 = vpow.pop %v382
      %v384 = vmul.f32 %v362, 1.442695
      %v385 = vpow.pop %v384
      %v386 = vmul.f32 %v363, 1.442695
      %v387 = vpow.pop %v386
      %v388 = vmul.f32 %v364, 1.442695
      %v389 = vpow.pop %v388
      %v390 = vmul.f32 %v365, 1.442695
      %v391 = vpow.pop %v390
      %v392 = vmul.f32 %v366, 1.442695
      %v393 = vpow.pop %v392
      %v394 = vmul.f32 %v367, 1.442695
      %v395 = vpow.pop %v394
      %v396 = vmul.f32 %v368, 1.442695
      %v397 = vpow.pop %v396
      %v398 = vmul.f32 %v369, 1.442695
      %v399 = vpow.pop %v398
      %v400 = vmul.f32 %v370, 1.442695
      %v401 = vpow.pop %v400
      %v402 = vmul.f32 %v371, 1.442695
      %v403 = vpow.pop %v402
      %v404 = vsel %vm291, %v389, 0.0
      %v405 = vadd.f32 %v373, %v404
      %v406 = vrot.slane %v405, 4
      %v407 = vadd.f32 %v405, %v406
      %v408 = vrot.slane %v407, 2
      %v409 = vadd.f32 %v407, %v408
      %v410 = vrot.slane %v409, 1
      %v411 = vadd.f32 %v409, %v410
      %v412 = vsel %vm291, %v391, 0.0
      %v413 = vadd.f32 %v375, %v412
      %v414 = vrot.slane %v413, 4
      %v415 = vadd.f32 %v413, %v414
      %v416 = vrot.slane %v415, 2
      %v417 = vadd.f32 %v415, %v416
      %v418 = vrot.slane %v417, 1
      %v419 = vadd.f32 %v417, %v418
      %v420 = vsel %vm291, %v393, 0.0
      %v421 = vadd.f32 %v377, %v420
      %v422 = vrot.slane %v421, 4
      %v423 = vadd.f32 %v421, %v422
      %v424 = vrot.slane %v423, 2
      %v425 = vadd.f32 %v423, %v424
      %v426 = vrot.slane %v425, 1
      %v427 = vadd.f32 %v425, %v426
      %v428 = vsel %vm291, %v395, 0.0
      %v429 = vadd.f32 %v379, %v428
      %v430 = vrot.slane %v429, 4
      %v431 = vadd.f32 %v429, %v430
      %v432 = vrot.slane %v431, 2
      %v433 = vadd.f32 %v431, %v432
      %v434 = vrot.slane %v433, 1
      %v435 = vadd.f32 %v433, %v434
      %v436 = vsel %vm291, %v397, 0.0
      %v437 = vadd.f32 %v381, %v436
      %v438 = vrot.slane %v437, 4
      %v439 = vadd.f32 %v437, %v438
      %v440 = vrot.slane %v439, 2
      %v441 = vadd.f32 %v439, %v440
      %v442 = vrot.slane %v441, 1
      %v443 = vadd.f32 %v441, %v442
      %v444 = vsel %vm291, %v399, 0.0
      %v445 = vadd.f32 %v383, %v444
      %v446 = vrot.slane %v445, 4
      %v447 = vadd.f32 %v445, %v446
      %v448 = vrot.slane %v447, 2
      %v449 = vadd.f32 %v447, %v448
      %v450 = vrot.slane %v449, 1
      %v451 = vadd.f32 %v449, %v450
      %v452 = vsel %vm291, %v401, 0.0
      %v453 = vadd.f32 %v385, %v452
      %v454 = vrot.slane %v453, 4
      %v455 = vadd.f32 %v453, %v454
      %v456 = vrot.slane %v455, 2
      %v457 = vadd.f32 %v455, %v456
      %v458 = vrot.slane %v457, 1
      %v459 = vadd.f32 %v457, %v458
      %v460 = vsel %vm291, %v403, 0.0
      %v461 = vadd.f32 %v387, %v460
      %v462 = vrot.slane %v461, 4
      %v463 = vadd.f32 %v461, %v462
      %v464 = vrot.slane %v463, 2
      %v465 = vadd.f32 %v463, %v464
      %v466 = vrot.slane %v465, 1
      %v467 = vadd.f32 %v465, %v466
      %v468 = vrcp.pop %v411
      %v469 = vmul.f32 1.0, %v468
      %v470 = vrcp.pop %v419
      %v471 = vmul.f32 1.0, %v470
      %v472 = vrcp.pop %v427
      %v473 = vmul.f32 1.0, %v472
      %v474 = vrcp.pop %v435
      %v475 = vmul.f32 1.0, %v474
      %v476 = vrcp.pop %v443
      %v477 = vmul.f32 1.0, %v476
      %v478 = vrcp.pop %v451
      %v479 = vmul.f32 1.0, %v478
      %v480 = vrcp.pop %v459
      %v481 = vmul.f32 1.0, %v480
      %v482 = vrcp.pop %v467
      %v483 = vmul.f32 1.0, %v482
      %v484 = vmul.f32 %v373, %v469
      %v485 = vmul.f32 %v375, %v471
      %v486 = vmul.f32 %v377, %v473
      %v487 = vmul.f32 %v379, %v475
      %v488 = vmul.f32 %v381, %v477
      %v489 = vmul.f32 %v383, %v479
      %v490 = vmul.f32 %v385, %v481
      %v491 = vmul.f32 %v387, %v483
      %v492 = vmul.f32 %v389, %v469
      %v493 = vmul.f32 %v391, %v471
      %v494 = vmul.f32 %v393, %v473
      %v495 = vmul.f32 %v395, %v475
      %v496 = vmul.f32 %v397, %v477
      %v497 = vmul.f32 %v399, %v479
      %v498 = vmul.f32 %v401, %v481
      %v499 = vmul.f32 %v403, %v483
      %v500 = vld [vmem:[#allocation2] sm:$0xff]
      %v501 = vld [vmem:[#allocation2 + $0x8] sm:$0x1]
      %v502 = vmul.f32 %v484, %v275
      %v503 = vmul.f32 %v485, %v276
      %v504 = vmul.f32 %v486, %v277
      %v505 = vmul.f32 %v487, %v278
      %v506 = vmul.f32 %v488, %v279
      %v507 = vmul.f32 %v489, %v280
      %v508 = vmul.f32 %v490, %v281
      %v509 = vmul.f32 %v491, %v282
      %v510 = vmul.f32 %v492, %v283
      %v511 = vmul.f32 %v493, %v284
      %v512 = vmul.f32 %v494, %v285
      %v513 = vmul.f32 %v495, %v286
      %v514 = vmul.f32 %v496, %v287
      %v515 = vmul.f32 %v497, %v288
      %v516 = vmul.f32 %v498, %v289
      %v517 = vmul.f32 %v499, %v290
      %v518 = vadd.f32 %v502, %v503
      %v519 = vadd.f32 %v518, %v504
      %v520 = vadd.f32 %v519, %v505
      %v521 = vadd.f32 %v520, %v506
      %v522 = vadd.f32 %v521, %v507
      %v523 = vadd.f32 %v522, %v508
      %v524 = vadd.f32 %v523, %v509
      %525 = vadd.xlane.f32.xlu0 %v524
      %v526 = vpop.xlane.xlu0 %525
      %v527 = vsel %vm291, %v510, 0.0
      %v528 = vsel %vm291, %v511, 0.0
      %v529 = vadd.f32 %v527, %v528
      %v530 = vsel %vm291, %v512, 0.0
      %v531 = vadd.f32 %v529, %v530
      %v532 = vsel %vm291, %v513, 0.0
      %v533 = vadd.f32 %v531, %v532
      %v534 = vsel %vm291, %v514, 0.0
      %v535 = vadd.f32 %v533, %v534
      %v536 = vsel %vm291, %v515, 0.0
      %v537 = vadd.f32 %v535, %v536
      %v538 = vsel %vm291, %v516, 0.0
      %v539 = vadd.f32 %v537, %v538
      %v540 = vsel %vm291, %v517, 0.0
      %v541 = vadd.f32 %v539, %v540
      %542 = vadd.xlane.f32.xlu0 %v541
      %v543 = vpop.xlane.xlu0 %542
      %v544 = vadd.f32 %v500, %v526
      %v545 = vadd.f32 %v501, %v543
      %vm546 = vcmask 7168
      %547 = vst.msk [vmem:[#allocation2] sm:$0xff] %vm546, %v544
      %vm548 = vcmask 0
      %549 = vst.msk [vmem:[#allocation2 + $0x8] sm:$0x1] %vm548, %v545
      %v550 = vld [vmem:[#allocation3] sm:$0xff]
      %v551 = vld [vmem:[#allocation3 + $0x8] sm:$0x1]
      %v552 = vadd.f32 %v484, %v485
      %v553 = vadd.f32 %v552, %v486
      %v554 = vadd.f32 %v553, %v487
      %v555 = vadd.f32 %v554, %v488
      %v556 = vadd.f32 %v555, %v489
      %v557 = vadd.f32 %v556, %v490
      %v558 = vadd.f32 %v557, %v491
      %559 = vadd.xlane.f32.xlu0 %v558
      %v560 = vpop.xlane.xlu0 %559
      %v561 = vsel %vm291, %v492, 0.0
      %v562 = vsel %vm291, %v493, 0.0
      %v563 = vadd.f32 %v561, %v562
      %v564 = vsel %vm291, %v494, 0.0
      %v565 = vadd.f32 %v563, %v564
      %v566 = vsel %vm291, %v495, 0.0
      %v567 = vadd.f32 %v565, %v566
      %v568 = vsel %vm291, %v496, 0.0
      %v569 = vadd.f32 %v567, %v568
      %v570 = vsel %vm291, %v497, 0.0
      %v571 = vadd.f32 %v569, %v570
      %v572 = vsel %vm291, %v498, 0.0
      %v573 = vadd.f32 %v571, %v572
      %v574 = vsel %vm291, %v499, 0.0
      %v575 = vadd.f32 %v573, %v574
      %576 = vadd.xlane.f32.xlu0 %v575
      %v577 = vpop.xlane.xlu0 %576
      %v578 = vadd.f32 %v550, %v560
      %v579 = vadd.f32 %v551, %v577
      %580 = vst.msk [vmem:[#allocation3] sm:$0xff] %vm546, %v578
      %581 = vst.msk [vmem:[#allocation3 + $0x8] sm:$0x1] %vm548, %v579
      %v582 = vld [vmem:[#allocation4] sm:$0xff]
      %v583 = vld [vmem:[#allocation4 + $0x8] sm:$0x1]
      %v584 = vadd.f32 %v275, %v276
      %v585 = vadd.f32 %v584, %v277
      %v586 = vadd.f32 %v585, %v278
      %v587 = vadd.f32 %v586, %v279
      %v588 = vadd.f32 %v587, %v280
      %v589 = vadd.f32 %v588, %v281
      %v590 = vadd.f32 %v589, %v282
      %591 = vadd.xlane.f32.xlu0 %v590
      %v592 = vpop.xlane.xlu0 %591
      %v593 = vsel %vm291, %v283, 0.0
      %v594 = vsel %vm291, %v284, 0.0
      %v595 = vadd.f32 %v593, %v594
      %v596 = vsel %vm291, %v285, 0.0
      %v597 = vadd.f32 %v595, %v596
      %v598 = vsel %vm291, %v286, 0.0
      %v599 = vadd.f32 %v597, %v598
      %v600 = vsel %vm291, %v287, 0.0
      %v601 = vadd.f32 %v599, %v600
      %v602 = vsel %vm291, %v288, 0.0
      %v603 = vadd.f32 %v601, %v602
      %v604 = vsel %vm291, %v289, 0.0
      %v605 = vadd.f32 %v603, %v604
      %v606 = vsel %vm291, %v290, 0.0
      %v607 = vadd.f32 %v605, %v606
      %608 = vadd.xlane.f32.xlu0 %v607
      %v609 = vpop.xlane.xlu0 %608
      %v610 = vadd.f32 %v582, %v592
      %v611 = vadd.f32 %v583, %v609
      %612 = vst.msk [vmem:[#allocation4] sm:$0xff] %vm546, %v610
      %613 = vst.msk [vmem:[#allocation4 + $0x8] sm:$0x1] %vm548, %v611
      // Predicated region
      $region33: #{tpu_custom_call.1} parent=27 // pred_check
        %p614 = pneg %p239
      $region34: #{tpu_custom_call.1} parent=27 // pred_check_branch
        %616 = sbr.rel (%p614) target = $region36
      $region35: #{tpu_custom_call.1} parent=27 // pred_region
        %v617 = vlaneseq
        %v618 = vand.u32 %v617, 127
        %vm619 = vcmp.eq.s32.totalorder %v618, 0
        %v620 = vld [vmem:[#allocation2] sm:$0xff]
        %v621 = vld [vmem:[#allocation2 + $0x8] sm:$0x1]
        %623 = vset.pattern.permute.xlu0 0
        %624 = vperm.xlu0 %623, %v620
        %v625 = vpop.permute.xlu0 %624
        %628 = vset.pattern.permute.xlu0 0
        %629 = vperm.xlu0 %628, %v621
        %v630 = vpop.permute.xlu0 %629
        %v632 = vsel %vm619, %v625, 0.0
        %v633 = vsel %vm619, %v630, 0.0
        %vm634 = vcmp.eq.s32.totalorder %v618, 1
        %v635 = vld [vmem:[#allocation3] sm:$0xff]
        %v636 = vld [vmem:[#allocation3 + $0x8] sm:$0x1]
        %638 = vset.pattern.permute.xlu0 0
        %639 = vperm.xlu0 %638, %v635
        %v640 = vpop.permute.xlu0 %639
        %643 = vset.pattern.permute.xlu0 0
        %644 = vperm.xlu0 %643, %v636
        %v645 = vpop.permute.xlu0 %644
        %v647 = vsel %vm634, %v640, %v632
        %v648 = vsel %vm634, %v645, %v633
        %vm649 = vcmp.eq.s32.totalorder %v618, 2
        %v650 = vld [vmem:[#allocation4] sm:$0xff]
        %v651 = vld [vmem:[#allocation4 + $0x8] sm:$0x1]
        %653 = vset.pattern.permute.xlu0 0
        %654 = vperm.xlu0 %653, %v650
        %v655 = vpop.permute.xlu0 %654
        %658 = vset.pattern.permute.xlu0 0
        %659 = vperm.xlu0 %658, %v651
        %v660 = vpop.permute.xlu0 %659
        %v662 = vsel %vm649, %v655, %v647
        %v663 = vsel %vm649, %v660, %v648
        %664 = vst [vmem:[%s238] sm:$0xff] %v662
        %665 = vst [vmem:[%s238 + $0x8] sm:$0x1] %v663
      $region36: #{tpu_custom_call.1} parent=27 // pred_fallthru
        _
      %p666 = scmp.lt.s32.totalorder %s18, 0
      %s667 = scalar_select %p666, %s18, 0
      %p668 = scmp.lt.s32.totalorder %s19, 1
      %s669 = scalar_select %p668, %s19, 1
      %s670 = smul.addr %s669, 2
      %s671 = smul.addr %s667, 4
      %s672 = sadd.s32 %s670, %s671
      %s673 = smul.addr %s672, 8
      %s674 = scalar_lea.vmem %s2, %s673
      // Predicated region
      $region37: #{tpu_custom_call.1} parent=27 // pred_check
        %p675 = pneg %p112
      $region38: #{tpu_custom_call.1} parent=27 // pred_check_branch
        %677 = sbr.rel (%p675) target = $region40
      $region39: #{tpu_custom_call.1} parent=27 // pred_region
        _
      $region40: #{tpu_custom_call.1} parent=27 // pred_fallthru
        _
    $region28: #{tpu_custom_call.1} parent=5 // pred_fallthru
      _
    %p678 = scmp.le.s32.totalorder 2, %s8
    // Predicated region
    $region41: #{tpu_custom_call.1} parent=5 // pred_check
      %p679 = pneg %p678
    $region42: #{tpu_custom_call.1} parent=5 // pred_check_branch
      %681 = sbr.rel (%p679) target = $region44
    $region43: #{tpu_custom_call.1} parent=5 // pred_region
      %s682 = ssub.s32 %s8, 2
      // Predicated region
      $region45: #{tpu_custom_call.1} parent=43 // pred_check
        %p683 = pneg %p118
      $region46: #{tpu_custom_call.1} parent=43 // pred_check_branch
        %685 = sbr.rel (%p683) target = $region48
      $region47: #{tpu_custom_call.1} parent=43 // pred_region
        %p686 = scmp.lt.s32.totalorder %s21, 0
        %s687 = scalar_select %p686, %s21, 0
        %p688 = scmp.lt.s32.totalorder %s22, 1
        %s689 = scalar_select %p688, %s22, 1
        %s690 = smul.addr %s689, 2
        %s691 = smul.addr %s687, 4
        %s692 = sadd.s32 %s690, %s691
        %s693 = smul.addr %s692, 8
        %s694 = scalar_lea.vmem %s2, %s693
      $region48: #{tpu_custom_call.1} parent=43 // pred_fallthru
        _
    $region44: #{tpu_custom_call.1} parent=5 // pred_fallthru
      _
  $region6: #{tpu_custom_call.1} parent=0 // loop_footer
    %s12 = sadd.s32 1, %s8
  $region7: #{tpu_custom_call.1} parent=0 // loop_footer_branch
    %7 = sbr.rel target = $region3
  $region8: #{tpu_custom_call.1} parent=0 // loop_exit
    _

</llo_original>
